<compile_context>
chip_gen: v6e
topology: v6e:2x2x1
jax: 0.10.0
libtpu: 0.0.40
codegen_flags: <defaults>
</compile_context>

<pallas_src>
import functools

import jax
import jax.numpy as jnp
from jax.experimental import pallas as pl
from jax.experimental.pallas import tpu as pltpu

LN_EPS = 1e-5  # nn.LayerNorm default


def _linear_relu_ln(h, w_ref, b_ref, g_ref, be_ref, matmul_dtype):
    """Fused Linear + ReLU + LayerNorm on a (TILE_B, D) tile.

    Only the dot operands are cast to `matmul_dtype` (bf16); accumulation and
    all elementwise / LayerNorm math stay in float32.
    """
    z = jnp.dot(h.astype(matmul_dtype), w_ref[...],
                preferred_element_type=jnp.float32)
    z = z + b_ref[...]
    z = jnp.maximum(z, 0.0)                                   # ReLU
    # One-pass LayerNorm statistics: var = E[z^2] - E[z]^2, clamped >= 0 so
    # f32 cancellation can never make rsqrt(var + eps) NaN.
    mean = jnp.mean(z, axis=-1, keepdims=True)
    mean_sq = jnp.mean(z * z, axis=-1, keepdims=True)
    var = jnp.maximum(mean_sq - mean * mean, 0.0)
    z_hat = (z - mean) * jax.lax.rsqrt(var + LN_EPS)
    return z_hat * g_ref[...] + be_ref[...]                   # Dropout(eval) = identity


def mlp_kernel(x_ref,
               w1_ref, b1_ref, g1_ref, be1_ref,
               w2_ref, b2_ref, g2_ref, be2_ref,
               w3_ref, b3_ref, g3_ref, be3_ref,
               w4_ref, b4_ref,
               o_ref, *, matmul_dtype):
    # Keep the input tile in its original dtype; the first dot casts to
    # matmul_dtype anyway, so a bf16 input needs no extra conversion.
    h = x_ref[...]
    h = _linear_relu_ln(h, w1_ref, b1_ref, g1_ref, be1_ref, matmul_dtype)
    h = _linear_relu_ln(h, w2_ref, b2_ref, g2_ref, be2_ref, matmul_dtype)
    h = _linear_relu_ln(h, w3_ref, b3_ref, g3_ref, be3_ref, matmul_dtype)
    # Head Linear(hidden, 1): w4 stored as (1, hidden) -> VPU mul + lane-sum
    # (keeps the MXU free and avoids a degenerate N=1 matmul).
    y = jnp.sum(h * w4_ref[...], axis=-1, keepdims=True) + b4_ref[...]
    # Narrow (tile_b, 1) store: only 4 real bytes/row hit HBM (128x fewer
    # writeback bytes than the old 128-lane broadcast slab).
    o_ref[...] = y.astype(o_ref.dtype)


def _choose_tile_b(B):
    """Pick a batch tile.

    Big enough to amortize the ~0.35 us/grid-step overhead and fill the MXU
    (M >= 256 on large batches), small enough to keep >= 2 grid steps when B
    allows (v7x has 2 TensorCores) and to stay far inside even v5e's 16 MiB
    default scoped VMEM.
    """
    def rup(v, m):
        return ((v + m - 1) // m) * m

    if B <= 512:
        # Small batch: one tile; a 2-way split would only under-fill the MXU.
        return rup(max(B, 8), 8)
    # Large batch: target ~1024 rows/tile but keep at least 2 grid steps.
    half = (B + 1) // 2
    return min(1024, rup(half, 128))


def mlp_forward(x, params, *, tile_b=None, matmul_dtype=jnp.bfloat16):
    """x: (B, input_dim) float32 (or bfloat16). params: flat list of 14 arrays
    (w, b, gamma, beta) x 3 layers + (w_out (hidden,1), b_out (1,1))."""
    B, d_in = x.shape
    hidden = params[0].shape[1]

    if tile_b is None:
        tile_b = _choose_tile_b(B)
    assert tile_b % 8 == 0, "tile_b must be a multiple of 8 (sublane tiling)"

    # Pad batch up to a multiple of the tile so every grid step is full.
    b_pad = ((B + tile_b - 1) // tile_b) * tile_b
    if b_pad != B:
        x = jnp.pad(x, ((0, b_pad - B), (0, 0)))
    grid = (b_pad // tile_b,)

    (w1, b1, g1, be1,
     w2, b2, g2, be2,
     w3, b3, g3, be3,
     w4, b4) = params

    # Hidden-layer matmul weights pre-cast to bf16 (halves DMA bytes / VMEM);
    # biases, LN params and the head weight stay f32 (VPU/XLU path).
    kern_params = [
        w1.astype(matmul_dtype), b1, g1, be1,
        w2.astype(matmul_dtype), b2, g2, be2,
        w3.astype(matmul_dtype), b3, g3, be3,
        w4.reshape(1, hidden), b4,
    ]

    def resident_spec(arr):
        nd = arr.ndim
        # Same block every grid step -> stays VMEM-resident, no re-DMA.
        return pl.BlockSpec(arr.shape, lambda i, _nd=nd: (0,) * _nd)

    in_specs = ([pl.BlockSpec((tile_b, d_in), lambda i: (i, 0))] +
                [resident_spec(p) for p in kern_params])
    # Narrow lane output: (tile_b, 1) blocks of a (b_pad, 1) array.
    out_specs = pl.BlockSpec((tile_b, 1), lambda i: (i, 0))

    out = pl.pallas_call(
        functools.partial(mlp_kernel, matmul_dtype=matmul_dtype),
        out_shape=jax.ShapeDtypeStruct((b_pad, 1), jnp.float32),
        grid=grid,
        in_specs=in_specs,
        out_specs=out_specs,
        compiler_params=pltpu.CompilerParams(
            dimension_semantics=("parallel",)),
    )(x, *kern_params)

    return out[:B]


def init_params(key, input_dim, hidden_dim=128, depth=3):
    """Deterministic init mimicking PyTorch defaults (uniform +-1/sqrt(fan_in)).
    Linear weights stored as (in_dim, out_dim); biases / LN params as (1, dim)."""
    params = []
    d_in = input_dim
    for _ in range(depth):
        key, kw, kb = jax.random.split(key, 3)
        bound = 1.0 / jnp.sqrt(d_in)
        w = jax.random.uniform(kw, (d_in, hidden_dim), jnp.float32, -bound, bound)
        b = jax.random.uniform(kb, (1, hidden_dim), jnp.float32, -bound, bound)
        gamma = jnp.ones((1, hidden_dim), jnp.float32)   # LayerNorm weight
        beta = jnp.zeros((1, hidden_dim), jnp.float32)   # LayerNorm bias
        params += [w, b, gamma, beta]
        d_in = hidden_dim
    key, kw, kb = jax.random.split(key, 3)
    bound = 1.0 / jnp.sqrt(hidden_dim)
    w_out = jax.random.uniform(kw, (hidden_dim, 1), jnp.float32, -bound, bound)
    b_out = jax.random.uniform(kb, (1, 1), jnp.float32, -bound, bound)
    params += [w_out, b_out]
    return params


def reference_forward_f32(x, params):
    """Pure-f32 JAX reference matching the PyTorch module (eval mode)."""
    h = x
    for i in range(3):
        w, b, g, be = params[4 * i:4 * i + 4]
        z = jnp.maximum(h @ w + b, 0.0)
        mean = jnp.mean(z, axis=-1, keepdims=True)
        var = jnp.mean((z - mean) ** 2, axis=-1, keepdims=True)
        h = (z - mean) * jax.lax.rsqrt(var + LN_EPS) * g + be
    return h @ params[-2] + params[-1]


def reference_forward_matched(x, params, matmul_dtype=jnp.bfloat16):
    """Reference using the same arithmetic as the kernel (bf16 dot operands,
    f32 accumulation, one-pass clamped variance, VPU head)."""
    h = x
    for i in range(3):
        w, b, g, be = params[4 * i:4 * i + 4]
        z = jnp.dot(h.astype(matmul_dtype), w.astype(matmul_dtype),
                    preferred_element_type=jnp.float32) + b
        z = jnp.maximum(z, 0.0)
        mean = jnp.mean(z, axis=-1, keepdims=True)
        var = jnp.maximum(jnp.mean(z * z, axis=-1, keepdims=True) - mean * mean, 0.0)
        h = (z - mean) * jax.lax.rsqrt(var + LN_EPS) * g + be
    w4 = params[-2].reshape(1, -1)
    return jnp.sum(h * w4, axis=-1, keepdims=True) + params[-1]


if __name__ == "__main__":
    key = jax.random.PRNGKey(0)
    B, INPUT_DIM, HIDDEN = 8, 32, 128

    key, kx, kp = jax.random.split(key, 3)
    x = jax.random.normal(kx, (B, INPUT_DIM), jnp.float32)
    params = init_params(kp, INPUT_DIM, HIDDEN, depth=3)

    out = jax.block_until_ready(mlp_forward(x, params))
    assert out.shape == (B, 1)

    ref_matched = reference_forward_matched(x, params)
    ref_f32 = reference_forward_f32(x, params)
    assert jnp.allclose(out, ref_matched, atol=2e-3, rtol=2e-3), \
        f"mismatch vs matched ref: {jnp.max(jnp.abs(out - ref_matched))}"
    assert jnp.allclose(out, ref_f32, atol=1e-1, rtol=1e-1), \
        f"mismatch vs f32 ref: {jnp.max(jnp.abs(out - ref_f32))}"

    # Multi-tile grid + batch-padding path (B not a tile multiple, explicit tile).
    B2 = 300
    key, kx2 = jax.random.split(key)
    x2 = jax.random.normal(kx2, (B2, INPUT_DIM), jnp.float32)
    out2 = jax.block_until_ready(mlp_forward(x2, params, tile_b=128))
    assert out2.shape == (B2, 1)
    assert jnp.allclose(out2, reference_forward_matched(x2, params),
                        atol=2e-3, rtol=2e-3)

    # Large-batch auto-tile path: 2 x 1024-row tiles (v7x-friendly, MXU-filling).
    B3 = 2048
    key, kx3 = jax.random.split(key)
    x3 = jax.random.normal(kx3, (B3, INPUT_DIM), jnp.float32)
    out3 = jax.block_until_ready(mlp_forward(x3, params))
    assert out3.shape == (B3, 1)
    assert jnp.allclose(out3, reference_forward_matched(x3, params),
                        atol=2e-3, rtol=2e-3)

    print("KERNEL_OK")
</pallas_src>

<mosaic_0001>
module attributes {stable_mosaic.version = 11 : i64} {
  func.func @mlp_kernel(%arg0: i32, %arg1: memref<8x32xf32, #tpu.memory_space<vmem>>, %arg2: memref<32x128xbf16, #tpu.memory_space<vmem>>, %arg3: memref<1x128xf32, #tpu.memory_space<vmem>>, %arg4: memref<1x128xf32, #tpu.memory_space<vmem>>, %arg5: memref<1x128xf32, #tpu.memory_space<vmem>>, %arg6: memref<128x128xbf16, #tpu.memory_space<vmem>>, %arg7: memref<1x128xf32, #tpu.memory_space<vmem>>, %arg8: memref<1x128xf32, #tpu.memory_space<vmem>>, %arg9: memref<1x128xf32, #tpu.memory_space<vmem>>, %arg10: memref<128x128xbf16, #tpu.memory_space<vmem>>, %arg11: memref<1x128xf32, #tpu.memory_space<vmem>>, %arg12: memref<1x128xf32, #tpu.memory_space<vmem>>, %arg13: memref<1x128xf32, #tpu.memory_space<vmem>>, %arg14: memref<1x128xf32, #tpu.memory_space<vmem>>, %arg15: memref<1x1xf32, #tpu.memory_space<vmem>>, %arg16: memref<8x1xf32, #tpu.memory_space<vmem>>) attributes {dimension_semantics = [#tpu.dimension_semantics<parallel>], iteration_bounds = array<i64: 1>, scalar_prefetch = 0 : i64, scratch_operands = 0 : i64, tpu.core_type = #tpu.core_type<tc>, window_params = [{transform_indices = @transform_0, window_bounds = array<i64: 8, 32>}, {pipeline_mode = #tpu.pipeline_mode<synchronous>, transform_indices = @transform_1, window_bounds = array<i64: 32, 128>}, {pipeline_mode = #tpu.pipeline_mode<synchronous>, transform_indices = @transform_2, window_bounds = array<i64: 1, 128>}, {pipeline_mode = #tpu.pipeline_mode<synchronous>, transform_indices = @transform_3, window_bounds = array<i64: 1, 128>}, {pipeline_mode = #tpu.pipeline_mode<synchronous>, transform_indices = @transform_4, window_bounds = array<i64: 1, 128>}, {pipeline_mode = #tpu.pipeline_mode<synchronous>, transform_indices = @transform_5, window_bounds = array<i64: 128, 128>}, {pipeline_mode = #tpu.pipeline_mode<synchronous>, transform_indices = @transform_6, window_bounds = array<i64: 1, 128>}, {pipeline_mode = #tpu.pipeline_mode<synchronous>, transform_indices = @transform_7, window_bounds = array<i64: 1, 128>}, {pipeline_mode = #tpu.pipeline_mode<synchronous>, transform_indices = @transform_8, window_bounds = array<i64: 1, 128>}, {pipeline_mode = #tpu.pipeline_mode<synchronous>, transform_indices = @transform_9, window_bounds = array<i64: 128, 128>}, {pipeline_mode = #tpu.pipeline_mode<synchronous>, transform_indices = @transform_10, window_bounds = array<i64: 1, 128>}, {pipeline_mode = #tpu.pipeline_mode<synchronous>, transform_indices = @transform_11, window_bounds = array<i64: 1, 128>}, {pipeline_mode = #tpu.pipeline_mode<synchronous>, transform_indices = @transform_12, window_bounds = array<i64: 1, 128>}, {pipeline_mode = #tpu.pipeline_mode<synchronous>, transform_indices = @transform_13, window_bounds = array<i64: 1, 128>}, {pipeline_mode = #tpu.pipeline_mode<synchronous>, transform_indices = @transform_14, window_bounds = array<i64: 1, 1>}, {transform_indices = @transform_15, window_bounds = array<i64: 8, 1>}]} {
    %c0 = arith.constant 0 : index
    %c0_0 = arith.constant 0 : index
    %0 = vector.load %arg1[%c0, %c0_0] : memref<8x32xf32, #tpu.memory_space<vmem>>, vector<8x32xf32>
    %1 = arith.truncf %0 : vector<8x32xf32> to vector<8x32xbf16>
    %c0_1 = arith.constant 0 : index
    %c0_2 = arith.constant 0 : index
    %2 = vector.load %arg2[%c0_1, %c0_2] : memref<32x128xbf16, #tpu.memory_space<vmem>>, vector<32x128xbf16>
    %cst = arith.constant dense<0.000000e+00> : vector<8x128xf32>
    %3 = tpu.matmul %1, %2, %cst {dimension_numbers = #tpu.dot_dimension_numbers<[1], [0], [0], [1], [0, 0, 1, 1], [], []>} : vector<8x32xbf16>, vector<32x128xbf16>, vector<8x128xf32> -> vector<8x128xf32>
    %c0_3 = arith.constant 0 : index
    %c0_4 = arith.constant 0 : index
    %4 = vector.load %arg3[%c0_3, %c0_4] : memref<1x128xf32, #tpu.memory_space<vmem>>, vector<1x128xf32>
    %5 = vector.broadcast %4 : vector<1x128xf32> to vector<8x128xf32>
    %6 = arith.addf %3, %5 : vector<8x128xf32>
    %cst_5 = arith.constant 0.000000e+00 : f32
    %7 = vector.broadcast %cst_5 : f32 to vector<8x128xf32>
    %8 = arith.maximumf %6, %7 : vector<8x128xf32>
    %cst_6 = arith.constant dense<0.000000e+00> : vector<8xf32>
    %9 = vector.multi_reduction <add>, %8, %cst_6 [1] : vector<8x128xf32> to vector<8xf32>
    %10 = vector.shape_cast %9 : vector<8xf32> to vector<8x1xf32>
    %cst_7 = arith.constant 1.280000e+02 : f32
    %11 = vector.broadcast %cst_7 : f32 to vector<8x1xf32>
    %12 = arith.divf %10, %11 : vector<8x1xf32>
    %13 = arith.mulf %8, %8 : vector<8x128xf32>
    %cst_8 = arith.constant dense<0.000000e+00> : vector<8xf32>
    %14 = vector.multi_reduction <add>, %13, %cst_8 [1] : vector<8x128xf32> to vector<8xf32>
    %15 = vector.shape_cast %14 : vector<8xf32> to vector<8x1xf32>
    %cst_9 = arith.constant 1.280000e+02 : f32
    %16 = vector.broadcast %cst_9 : f32 to vector<8x1xf32>
    %17 = arith.divf %15, %16 : vector<8x1xf32>
    %18 = arith.mulf %12, %12 : vector<8x1xf32>
    %19 = arith.subf %17, %18 : vector<8x1xf32>
    %cst_10 = arith.constant 0.000000e+00 : f32
    %20 = vector.broadcast %cst_10 : f32 to vector<8x1xf32>
    %21 = arith.maximumf %19, %20 : vector<8x1xf32>
    %22 = vector.broadcast %12 : vector<8x1xf32> to vector<8x128xf32>
    %23 = arith.subf %8, %22 : vector<8x128xf32>
    %cst_11 = arith.constant 9.99999974E-6 : f32
    %24 = vector.broadcast %cst_11 : f32 to vector<8x1xf32>
    %25 = arith.addf %21, %24 : vector<8x1xf32>
    %26 = math.rsqrt %25 : vector<8x1xf32>
    %27 = vector.broadcast %26 : vector<8x1xf32> to vector<8x128xf32>
    %28 = arith.mulf %23, %27 : vector<8x128xf32>
    %c0_12 = arith.constant 0 : index
    %c0_13 = arith.constant 0 : index
    %29 = vector.load %arg4[%c0_12, %c0_13] : memref<1x128xf32, #tpu.memory_space<vmem>>, vector<1x128xf32>
    %30 = vector.broadcast %29 : vector<1x128xf32> to vector<8x128xf32>
    %31 = arith.mulf %28, %30 : vector<8x128xf32>
    %c0_14 = arith.constant 0 : index
    %c0_15 = arith.constant 0 : index
    %32 = vector.load %arg5[%c0_14, %c0_15] : memref<1x128xf32, #tpu.memory_space<vmem>>, vector<1x128xf32>
    %33 = vector.broadcast %32 : vector<1x128xf32> to vector<8x128xf32>
    %34 = arith.addf %31, %33 : vector<8x128xf32>
    %35 = arith.truncf %34 : vector<8x128xf32> to vector<8x128xbf16>
    %c0_16 = arith.constant 0 : index
    %c0_17 = arith.constant 0 : index
    %36 = vector.load %arg6[%c0_16, %c0_17] : memref<128x128xbf16, #tpu.memory_space<vmem>>, vector<128x128xbf16>
    %cst_18 = arith.constant dense<0.000000e+00> : vector<8x128xf32>
    %37 = tpu.matmul %35, %36, %cst_18 {dimension_numbers = #tpu.dot_dimension_numbers<[1], [0], [0], [1], [0, 0, 1, 1], [], []>} : vector<8x128xbf16>, vector<128x128xbf16>, vector<8x128xf32> -> vector<8x128xf32>
    %c0_19 = arith.constant 0 : index
    %c0_20 = arith.constant 0 : index
    %38 = vector.load %arg7[%c0_19, %c0_20] : memref<1x128xf32, #tpu.memory_space<vmem>>, vector<1x128xf32>
    %39 = vector.broadcast %38 : vector<1x128xf32> to vector<8x128xf32>
    %40 = arith.addf %37, %39 : vector<8x128xf32>
    %cst_21 = arith.constant 0.000000e+00 : f32
    %41 = vector.broadcast %cst_21 : f32 to vector<8x128xf32>
    %42 = arith.maximumf %40, %41 : vector<8x128xf32>
    %cst_22 = arith.constant dense<0.000000e+00> : vector<8xf32>
    %43 = vector.multi_reduction <add>, %42, %cst_22 [1] : vector<8x128xf32> to vector<8xf32>
    %44 = vector.shape_cast %43 : vector<8xf32> to vector<8x1xf32>
    %cst_23 = arith.constant 1.280000e+02 : f32
    %45 = vector.broadcast %cst_23 : f32 to vector<8x1xf32>
    %46 = arith.divf %44, %45 : vector<8x1xf32>
    %47 = arith.mulf %42, %42 : vector<8x128xf32>
    %cst_24 = arith.constant dense<0.000000e+00> : vector<8xf32>
    %48 = vector.multi_reduction <add>, %47, %cst_24 [1] : vector<8x128xf32> to vector<8xf32>
    %49 = vector.shape_cast %48 : vector<8xf32> to vector<8x1xf32>
    %cst_25 = arith.constant 1.280000e+02 : f32
    %50 = vector.broadcast %cst_25 : f32 to vector<8x1xf32>
    %51 = arith.divf %49, %50 : vector<8x1xf32>
    %52 = arith.mulf %46, %46 : vector<8x1xf32>
    %53 = arith.subf %51, %52 : vector<8x1xf32>
    %cst_26 = arith.constant 0.000000e+00 : f32
    %54 = vector.broadcast %cst_26 : f32 to vector<8x1xf32>
    %55 = arith.maximumf %53, %54 : vector<8x1xf32>
    %56 = vector.broadcast %46 : vector<8x1xf32> to vector<8x128xf32>
    %57 = arith.subf %42, %56 : vector<8x128xf32>
    %cst_27 = arith.constant 9.99999974E-6 : f32
    %58 = vector.broadcast %cst_27 : f32 to vector<8x1xf32>
    %59 = arith.addf %55, %58 : vector<8x1xf32>
    %60 = math.rsqrt %59 : vector<8x1xf32>
    %61 = vector.broadcast %60 : vector<8x1xf32> to vector<8x128xf32>
    %62 = arith.mulf %57, %61 : vector<8x128xf32>
    %c0_28 = arith.constant 0 : index
    %c0_29 = arith.constant 0 : index
    %63 = vector.load %arg8[%c0_28, %c0_29] : memref<1x128xf32, #tpu.memory_space<vmem>>, vector<1x128xf32>
    %64 = vector.broadcast %63 : vector<1x128xf32> to vector<8x128xf32>
    %65 = arith.mulf %62, %64 : vector<8x128xf32>
    %c0_30 = arith.constant 0 : index
    %c0_31 = arith.constant 0 : index
    %66 = vector.load %arg9[%c0_30, %c0_31] : memref<1x128xf32, #tpu.memory_space<vmem>>, vector<1x128xf32>
    %67 = vector.broadcast %66 : vector<1x128xf32> to vector<8x128xf32>
    %68 = arith.addf %65, %67 : vector<8x128xf32>
    %69 = arith.truncf %68 : vector<8x128xf32> to vector<8x128xbf16>
    %c0_32 = arith.constant 0 : index
    %c0_33 = arith.constant 0 : index
    %70 = vector.load %arg10[%c0_32, %c0_33] : memref<128x128xbf16, #tpu.memory_space<vmem>>, vector<128x128xbf16>
    %cst_34 = arith.constant dense<0.000000e+00> : vector<8x128xf32>
    %71 = tpu.matmul %69, %70, %cst_34 {dimension_numbers = #tpu.dot_dimension_numbers<[1], [0], [0], [1], [0, 0, 1, 1], [], []>} : vector<8x128xbf16>, vector<128x128xbf16>, vector<8x128xf32> -> vector<8x128xf32>
    %c0_35 = arith.constant 0 : index
    %c0_36 = arith.constant 0 : index
    %72 = vector.load %arg11[%c0_35, %c0_36] : memref<1x128xf32, #tpu.memory_space<vmem>>, vector<1x128xf32>
    %73 = vector.broadcast %72 : vector<1x128xf32> to vector<8x128xf32>
    %74 = arith.addf %71, %73 : vector<8x128xf32>
    %cst_37 = arith.constant 0.000000e+00 : f32
    %75 = vector.broadcast %cst_37 : f32 to vector<8x128xf32>
    %76 = arith.maximumf %74, %75 : vector<8x128xf32>
    %cst_38 = arith.constant dense<0.000000e+00> : vector<8xf32>
    %77 = vector.multi_reduction <add>, %76, %cst_38 [1] : vector<8x128xf32> to vector<8xf32>
    %78 = vector.shape_cast %77 : vector<8xf32> to vector<8x1xf32>
    %cst_39 = arith.constant 1.280000e+02 : f32
    %79 = vector.broadcast %cst_39 : f32 to vector<8x1xf32>
    %80 = arith.divf %78, %79 : vector<8x1xf32>
    %81 = arith.mulf %76, %76 : vector<8x128xf32>
    %cst_40 = arith.constant dense<0.000000e+00> : vector<8xf32>
    %82 = vector.multi_reduction <add>, %81, %cst_40 [1] : vector<8x128xf32> to vector<8xf32>
    %83 = vector.shape_cast %82 : vector<8xf32> to vector<8x1xf32>
    %cst_41 = arith.constant 1.280000e+02 : f32
    %84 = vector.broadcast %cst_41 : f32 to vector<8x1xf32>
    %85 = arith.divf %83, %84 : vector<8x1xf32>
    %86 = arith.mulf %80, %80 : vector<8x1xf32>
    %87 = arith.subf %85, %86 : vector<8x1xf32>
    %cst_42 = arith.constant 0.000000e+00 : f32
    %88 = vector.broadcast %cst_42 : f32 to vector<8x1xf32>
    %89 = arith.maximumf %87, %88 : vector<8x1xf32>
    %90 = vector.broadcast %80 : vector<8x1xf32> to vector<8x128xf32>
    %91 = arith.subf %76, %90 : vector<8x128xf32>
    %cst_43 = arith.constant 9.99999974E-6 : f32
    %92 = vector.broadcast %cst_43 : f32 to vector<8x1xf32>
    %93 = arith.addf %89, %92 : vector<8x1xf32>
    %94 = math.rsqrt %93 : vector<8x1xf32>
    %95 = vector.broadcast %94 : vector<8x1xf32> to vector<8x128xf32>
    %96 = arith.mulf %91, %95 : vector<8x128xf32>
    %c0_44 = arith.constant 0 : index
    %c0_45 = arith.constant 0 : index
    %97 = vector.load %arg12[%c0_44, %c0_45] : memref<1x128xf32, #tpu.memory_space<vmem>>, vector<1x128xf32>
    %98 = vector.broadcast %97 : vector<1x128xf32> to vector<8x128xf32>
    %99 = arith.mulf %96, %98 : vector<8x128xf32>
    %c0_46 = arith.constant 0 : index
    %c0_47 = arith.constant 0 : index
    %100 = vector.load %arg13[%c0_46, %c0_47] : memref<1x128xf32, #tpu.memory_space<vmem>>, vector<1x128xf32>
    %101 = vector.broadcast %100 : vector<1x128xf32> to vector<8x128xf32>
    %102 = arith.addf %99, %101 : vector<8x128xf32>
    %c0_48 = arith.constant 0 : index
    %c0_49 = arith.constant 0 : index
    %103 = vector.load %arg14[%c0_48, %c0_49] : memref<1x128xf32, #tpu.memory_space<vmem>>, vector<1x128xf32>
    %104 = vector.broadcast %103 : vector<1x128xf32> to vector<8x128xf32>
    %105 = arith.mulf %102, %104 : vector<8x128xf32>
    %cst_50 = arith.constant dense<0.000000e+00> : vector<8xf32>
    %106 = vector.multi_reduction <add>, %105, %cst_50 [1] : vector<8x128xf32> to vector<8xf32>
    %107 = vector.shape_cast %106 : vector<8xf32> to vector<8x1xf32>
    %c0_51 = arith.constant 0 : index
    %c0_52 = arith.constant 0 : index
    %108 = vector.load %arg15[%c0_51, %c0_52] : memref<1x1xf32, #tpu.memory_space<vmem>>, vector<1x1xf32>
    %109 = vector.broadcast %108 : vector<1x1xf32> to vector<8x1xf32>
    %110 = arith.addf %107, %109 : vector<8x1xf32>
    %c0_53 = arith.constant 0 : index
    %c0_54 = arith.constant 0 : index
    %111 = vector.load %arg16[%c0_53, %c0_54] : memref<8x1xf32, #tpu.memory_space<vmem>>, vector<8x1xf32>
    tpu.vector_store %arg16[%c0_53, %c0_54], %110 {strides = array<i32>} : memref<8x1xf32, #tpu.memory_space<vmem>>, vector<8x1xf32>,
    return
  }
  func.func @transform_0(%arg0: i32) -> (i32, i32) {
    %c0_i32 = arith.constant 0 : i32
    %c0_i32_0 = arith.constant 0 : i32
    return %arg0, %c0_i32 : i32, i32
  }
  func.func @transform_1(%arg0: i32) -> (i32, i32) {
    %c0_i32 = arith.constant 0 : i32
    %c0_i32_0 = arith.constant 0 : i32
    %c0_i32_1 = arith.constant 0 : i32
    return %c0_i32, %c0_i32_0 : i32, i32
  }
  func.func @transform_2(%arg0: i32) -> (i32, i32) {
    %c0_i32 = arith.constant 0 : i32
    %c0_i32_0 = arith.constant 0 : i32
    %c0_i32_1 = arith.constant 0 : i32
    return %c0_i32, %c0_i32_0 : i32, i32
  }
  func.func @transform_3(%arg0: i32) -> (i32, i32) {
    %c0_i32 = arith.constant 0 : i32
    %c0_i32_0 = arith.constant 0 : i32
    %c0_i32_1 = arith.constant 0 : i32
    return %c0_i32, %c0_i32_0 : i32, i32
  }
  func.func @transform_4(%arg0: i32) -> (i32, i32) {
    %c0_i32 = arith.constant 0 : i32
    %c0_i32_0 = arith.constant 0 : i32
    %c0_i32_1 = arith.constant 0 : i32
    return %c0_i32, %c0_i32_0 : i32, i32
  }
  func.func @transform_5(%arg0: i32) -> (i32, i32) {
    %c0_i32 = arith.constant 0 : i32
    %c0_i32_0 = arith.constant 0 : i32
    %c0_i32_1 = arith.constant 0 : i32
    return %c0_i32, %c0_i32_0 : i32, i32
  }
  func.func @transform_6(%arg0: i32) -> (i32, i32) {
    %c0_i32 = arith.constant 0 : i32
    %c0_i32_0 = arith.constant 0 : i32
    %c0_i32_1 = arith.constant 0 : i32
    return %c0_i32, %c0_i32_0 : i32, i32
  }
  func.func @transform_7(%arg0: i32) -> (i32, i32) {
    %c0_i32 = arith.constant 0 : i32
    %c0_i32_0 = arith.constant 0 : i32
    %c0_i32_1 = arith.constant 0 : i32
    return %c0_i32, %c0_i32_0 : i32, i32
  }
  func.func @transform_8(%arg0: i32) -> (i32, i32) {
    %c0_i32 = arith.constant 0 : i32
    %c0_i32_0 = arith.constant 0 : i32
    %c0_i32_1 = arith.constant 0 : i32
    return %c0_i32, %c0_i32_0 : i32, i32
  }
  func.func @transform_9(%arg0: i32) -> (i32, i32) {
    %c0_i32 = arith.constant 0 : i32
    %c0_i32_0 = arith.constant 0 : i32
    %c0_i32_1 = arith.constant 0 : i32
    return %c0_i32, %c0_i32_0 : i32, i32
  }
  func.func @transform_10(%arg0: i32) -> (i32, i32) {
    %c0_i32 = arith.constant 0 : i32
    %c0_i32_0 = arith.constant 0 : i32
    %c0_i32_1 = arith.constant 0 : i32
    return %c0_i32, %c0_i32_0 : i32, i32
  }
  func.func @transform_11(%arg0: i32) -> (i32, i32) {
    %c0_i32 = arith.constant 0 : i32
    %c0_i32_0 = arith.constant 0 : i32
    %c0_i32_1 = arith.constant 0 : i32
    return %c0_i32, %c0_i32_0 : i32, i32
  }
  func.func @transform_12(%arg0: i32) -> (i32, i32) {
    %c0_i32 = arith.constant 0 : i32
    %c0_i32_0 = arith.constant 0 : i32
    %c0_i32_1 = arith.constant 0 : i32
    return %c0_i32, %c0_i32_0 : i32, i32
  }
  func.func @transform_13(%arg0: i32) -> (i32, i32) {
    %c0_i32 = arith.constant 0 : i32
    %c0_i32_0 = arith.constant 0 : i32
    %c0_i32_1 = arith.constant 0 : i32
    return %c0_i32, %c0_i32_0 : i32, i32
  }
  func.func @transform_14(%arg0: i32) -> (i32, i32) {
    %c0_i32 = arith.constant 0 : i32
    %c0_i32_0 = arith.constant 0 : i32
    %c0_i32_1 = arith.constant 0 : i32
    return %c0_i32, %c0_i32_0 : i32, i32
  }
  func.func @transform_15(%arg0: i32) -> (i32, i32) {
    %c0_i32 = arith.constant 0 : i32
    %c0_i32_0 = arith.constant 0 : i32
    return %arg0, %c0_i32 : i32, i32
  }
}

</mosaic_0001>

<llo_original>
// kernel: tpu_custom_call.1
$region0: #{tpu_custom_call.1}
  #allocation0 [shape = 'u32[]', space=smem, size = 0x4, offset = 0x4, fixed_abs, tag = 'smem constant byte address 0x4 - core index']
  #allocation1 [shape = 'u32[144,128]{1,0:T(1,128)}', space=vmem, size = 0x12000, scoped, tag = 'internal scratch']
  #allocation2 [shape = 'f32[1,1]{1,0:T(1,128)S(1)}', space=vmem, size = 0x200, scoped, tag = 'scoped memory for tpu_custom_call.1']
  %s0 = inlined_call_operand.hbm [shape: f32[8,32], index: 0, kind: input, shape index: {}]
  %s1 = inlined_call_operand.hbm [shape: bf16[32,128], index: 1, kind: input, shape index: {}]
  %s2 = inlined_call_operand.vmem [shape: f32[1,128], index: 2, kind: input, shape index: {}]
  %s3 = inlined_call_operand.vmem [shape: f32[1,128], index: 3, kind: input, shape index: {}]
  %s4 = inlined_call_operand.vmem [shape: f32[1,128], index: 4, kind: input, shape index: {}]
  %s5 = inlined_call_operand.hbm [shape: bf16[128,128], index: 5, kind: input, shape index: {}]
  %s6 = inlined_call_operand.vmem [shape: f32[1,128], index: 6, kind: input, shape index: {}]
  %s7 = inlined_call_operand.vmem [shape: f32[1,128], index: 7, kind: input, shape index: {}]
  %s8 = inlined_call_operand.vmem [shape: f32[1,128], index: 8, kind: input, shape index: {}]
  %s9 = inlined_call_operand.hbm [shape: bf16[128,128], index: 9, kind: input, shape index: {}]
  %s10 = inlined_call_operand.vmem [shape: f32[1,128], index: 10, kind: input, shape index: {}]
  %s11 = inlined_call_operand.vmem [shape: f32[1,128], index: 11, kind: input, shape index: {}]
  %s12 = inlined_call_operand.vmem [shape: f32[1,128], index: 12, kind: input, shape index: {}]
  %s13 = inlined_call_operand.vmem [shape: f32[1,128], index: 13, kind: input, shape index: {}]
  %s14 = inlined_call_operand.<no memory space> [shape: f32[1,1], index: 14, kind: input, shape index: {}]
  %s15 = inlined_call_operand.vmem [shape: f32[8,1], index: 15, kind: output, shape index: {}]
  %s16 = sld [smem:[#allocation0]]
  $region86: #{tpu_custom_call.1} parent=0
    _
  %s18 = ssub.s32 1, %s16
  %s19 = scalar_select 0, %s18, %s16
  %v20 = vstv %s14
  %21 = vst [vmem:[#allocation2] sm:$0x1] %v20
  $region1: #{tpu_custom_call.1} parent=0
    #allocation3 [shape = 'u8[4096]{0}', space=vmem, size = 0x1000, scoped, tag = 'input window, operand 0, single buffered']
    #allocation4 [shape = 's32[1]{0}', space=sflag, size = 0x4, scoped, tag = 'scoped memory for tpu_custom_call.1']
    #allocation5 [shape = 'u8[8192]{0}', space=vmem, size = 0x2000, scoped, tag = 'input window, operand 1, single buffered']
    #allocation6 [shape = 's32[1]{0}', space=sflag, size = 0x4, scoped, tag = 'scoped memory for tpu_custom_call.1']
    #allocation7 [shape = 'u8[32768]{0}', space=vmem, size = 0x8000, scoped, tag = 'input window, operand 5, single buffered']
    #allocation8 [shape = 'u8[32768]{0}', space=vmem, size = 0x8000, scoped, tag = 'input window, operand 9, single buffered']
    #allocation9 [shape = 's32[1]{0}', space=sflag, size = 0x4, scoped, tag = 'scoped memory for tpu_custom_call.1']
    %22 = vsyncpa [#allocation4], 0
    %23 = vsyncpa [#allocation6], 0
    %24 = vsyncpa [#allocation9], 0
    // Predicated region
    $region2: #{tpu_custom_call.1} parent=1 // pred_check
      _
    $region3: #{tpu_custom_call.1} parent=1 // pred_check_branch
      %26 = sbr.rel (0) target = $region5
    $region4: #{tpu_custom_call.1} parent=1 // pred_region
      %s28 = ssub.s32 128, 128
      %29 = vsyncadd [#allocation4], %s28
      %s31 = sshll.u32 [#allocation3], 4
      %s32 = int_to_ptr.vmem [resolvable:$true] %s31
      %34 = dma.hbm_to_vmem [thread:$0]  %s0, 128, %s32, [#allocation4]
    $region5: #{tpu_custom_call.1} parent=1 // pred_fallthru
      _
    // Predicated region
    $region6: #{tpu_custom_call.1} parent=1 // pred_check
      _
    $region7: #{tpu_custom_call.1} parent=1 // pred_check_branch
      %36 = sbr.rel (0) target = $region9
    $region8: #{tpu_custom_call.1} parent=1 // pred_region
      %s38 = ssub.s32 256, 256
      %39 = vsyncadd [#allocation6], %s38
      %s40 = sshll.u32 [#allocation5], 4
      %s41 = int_to_ptr.vmem [resolvable:$true] %s40
      %46 = dma.hbm_to_vmem [thread:$0]  %s1, 256, %s41, [#allocation6], 64, 64, 4
    $region9: #{tpu_custom_call.1} parent=1 // pred_fallthru
      _
    // Predicated region
    $region10: #{tpu_custom_call.1} parent=1 // pred_check
      _
    $region11: #{tpu_custom_call.1} parent=1 // pred_check_branch
      %48 = sbr.rel (0) target = $region13
    $region12: #{tpu_custom_call.1} parent=1 // pred_region
      _
    $region13: #{tpu_custom_call.1} parent=1 // pred_fallthru
      _
    // Predicated region
    $region14: #{tpu_custom_call.1} parent=1 // pred_check
      _
    $region15: #{tpu_custom_call.1} parent=1 // pred_check_branch
      %50 = sbr.rel (0) target = $region17
    $region16: #{tpu_custom_call.1} parent=1 // pred_region
      _
    $region17: #{tpu_custom_call.1} parent=1 // pred_fallthru
      _
    // Predicated region
    $region18: #{tpu_custom_call.1} parent=1 // pred_check
      _
    $region19: #{tpu_custom_call.1} parent=1 // pred_check_branch
      %52 = sbr.rel (0) target = $region21
    $region20: #{tpu_custom_call.1} parent=1 // pred_region
      _
    $region21: #{tpu_custom_call.1} parent=1 // pred_fallthru
      _
    // Predicated region
    $region22: #{tpu_custom_call.1} parent=1 // pred_check
      _
    $region23: #{tpu_custom_call.1} parent=1 // pred_check_branch
      %54 = sbr.rel (0) target = $region25
    $region24: #{tpu_custom_call.1} parent=1 // pred_region
      %s56 = ssub.s32 1024, 1024
      %57 = vsyncadd [#allocation6], %s56
      %s58 = sshll.u32 [#allocation7], 4
      %s59 = int_to_ptr.vmem [resolvable:$true] %s58
      %64 = dma.hbm_to_vmem [thread:$0]  %s5, 1024, %s59, [#allocation6], 64, 64, 4
    $region25: #{tpu_custom_call.1} parent=1 // pred_fallthru
      _
    // Predicated region
    $region26: #{tpu_custom_call.1} parent=1 // pred_check
      _
    $region27: #{tpu_custom_call.1} parent=1 // pred_check_branch
      %66 = sbr.rel (0) target = $region29
    $region28: #{tpu_custom_call.1} parent=1 // pred_region
      _
    $region29: #{tpu_custom_call.1} parent=1 // pred_fallthru
      _
    // Predicated region
    $region30: #{tpu_custom_call.1} parent=1 // pred_check
      _
    $region31: #{tpu_custom_call.1} parent=1 // pred_check_branch
      %68 = sbr.rel (0) target = $region33
    $region32: #{tpu_custom_call.1} parent=1 // pred_region
      _
    $region33: #{tpu_custom_call.1} parent=1 // pred_fallthru
      _
    // Predicated region
    $region34: #{tpu_custom_call.1} parent=1 // pred_check
      _
    $region35: #{tpu_custom_call.1} parent=1 // pred_check_branch
      %70 = sbr.rel (0) target = $region37
    $region36: #{tpu_custom_call.1} parent=1 // pred_region
      _
    $region37: #{tpu_custom_call.1} parent=1 // pred_fallthru
      _
    // Predicated region
    $region38: #{tpu_custom_call.1} parent=1 // pred_check
      _
    $region39: #{tpu_custom_call.1} parent=1 // pred_check_branch
      %72 = sbr.rel (0) target = $region41
    $region40: #{tpu_custom_call.1} parent=1 // pred_region
      %s74 = ssub.s32 1024, 1024
      %75 = vsyncadd [#allocation9], %s74
      %s76 = sshll.u32 [#allocation8], 4
      %s77 = int_to_ptr.vmem [resolvable:$true] %s76
      %82 = dma.hbm_to_vmem [thread:$0]  %s9, 1024, %s77, [#allocation9], 64, 64, 4
    $region41: #{tpu_custom_call.1} parent=1 // pred_fallthru
      _
    // Predicated region
    $region42: #{tpu_custom_call.1} parent=1 // pred_check
      _
    $region43: #{tpu_custom_call.1} parent=1 // pred_check_branch
      %84 = sbr.rel (0) target = $region45
    $region44: #{tpu_custom_call.1} parent=1 // pred_region
      _
    $region45: #{tpu_custom_call.1} parent=1 // pred_fallthru
      _
    // Predicated region
    $region46: #{tpu_custom_call.1} parent=1 // pred_check
      _
    $region47: #{tpu_custom_call.1} parent=1 // pred_check_branch
      %86 = sbr.rel (0) target = $region49
    $region48: #{tpu_custom_call.1} parent=1 // pred_region
      _
    $region49: #{tpu_custom_call.1} parent=1 // pred_fallthru
      _
    // Predicated region
    $region50: #{tpu_custom_call.1} parent=1 // pred_check
      _
    $region51: #{tpu_custom_call.1} parent=1 // pred_check_branch
      %88 = sbr.rel (0) target = $region53
    $region52: #{tpu_custom_call.1} parent=1 // pred_region
      _
    $region53: #{tpu_custom_call.1} parent=1 // pred_fallthru
      _
    // Predicated region
    $region54: #{tpu_custom_call.1} parent=1 // pred_check
      _
    $region55: #{tpu_custom_call.1} parent=1 // pred_check_branch
      %90 = sbr.rel (0) target = $region57
    $region56: #{tpu_custom_call.1} parent=1 // pred_region
      _
    $region57: #{tpu_custom_call.1} parent=1 // pred_fallthru
      _
    // Predicated region
    $region58: #{tpu_custom_call.1} parent=1 // pred_check
      _
    $region59: #{tpu_custom_call.1} parent=1 // pred_check_branch
      %92 = sbr.rel (0) target = $region61
    $region60: #{tpu_custom_call.1} parent=1 // pred_region
      _
    $region61: #{tpu_custom_call.1} parent=1 // pred_fallthru
      _
    // Predicated region
    $region62: #{tpu_custom_call.1} parent=1 // pred_check
      _
    $region63: #{tpu_custom_call.1} parent=1 // pred_check_branch
      %94 = sbr.rel (0) target = $region65
    $region64: #{tpu_custom_call.1} parent=1 // pred_region
      %95 = dma.done [#allocation4], 128
    $region65: #{tpu_custom_call.1} parent=1 // pred_fallthru
      _
    // Predicated region
    $region66: #{tpu_custom_call.1} parent=1 // pred_check
      _
    $region67: #{tpu_custom_call.1} parent=1 // pred_check_branch
      %97 = sbr.rel (0) target = $region69
    $region68: #{tpu_custom_call.1} parent=1 // pred_region
      %98 = dma.done [#allocation6], 256
    $region69: #{tpu_custom_call.1} parent=1 // pred_fallthru
      _
    // Predicated region
    $region70: #{tpu_custom_call.1} parent=1 // pred_check
      _
    $region71: #{tpu_custom_call.1} parent=1 // pred_check_branch
      %100 = sbr.rel (0) target = $region73
    $region72: #{tpu_custom_call.1} parent=1 // pred_region
      %101 = dma.done [#allocation6], 1024
    $region73: #{tpu_custom_call.1} parent=1 // pred_fallthru
      _
    // Predicated region
    $region74: #{tpu_custom_call.1} parent=1 // pred_check
      _
    $region75: #{tpu_custom_call.1} parent=1 // pred_check_branch
      %103 = sbr.rel (0) target = $region77
    $region76: #{tpu_custom_call.1} parent=1 // pred_region
      %104 = dma.done [#allocation9], 1024
    $region77: #{tpu_custom_call.1} parent=1 // pred_fallthru
      _
    %v106 = vld [vmem:[#allocation3] sm:$0xff]
    %v107 = vpack.c.bf16 %v106, %v106
    %v108 = vld [vmem:[#allocation5] sm:$0xf]
    %v109 = vld [vmem:[#allocation5 + $0x4] sm:$0xf]
    %v110 = vld [vmem:[#allocation5 + $0x8] sm:$0xf]
    %v111 = vld [vmem:[#allocation5 + $0xc] sm:$0xf]
    %v112 = vld [vmem:[%s2] sm:$0x1]
    %v114 = vlaneseq
    %v115 = vshrl.u32 %v114, 7
    %v116 = vsub.s32 0, %v115
    %v117 = vrot.slane %v112, %v116
    %v123 = vunpack.c.l.b16 %v108
    %v124 = vunpack.c.l.b16 %v109
    %v125 = vunpack.c.l.b16 %v110
    %v126 = vunpack.c.l.b16 %v111
    %v127 = vpack.c.b16 %v124, %v123
    %v128 = vpack.c.b16 %v126, %v125
    %vm131 = vcmask 261120
    %v133 = vsel %vm131, %v107, 0
    %135 = vmatprep.subr.bf16.mxu0 0
    %136 = vmatpush1.bf16.msra.mxu0 0
    %137 = vmatprep.subr.bf16.mxu0 0
    %138 = vmatpush1.bf16.msra.mxu0 0
    %139 = vmatprep.subr.bf16.mxu0 0
    %140 = vmatpush1.bf16.msra.mxu0 0
    %141 = vmatprep.subr.bf16.mxu0 0
    %142 = vmatpush1.bf16.msra.mxu0 0
    %143 = vmatprep.subr.bf16.mxu0 0
    %144 = vmatpush1.bf16.msra.mxu0 0
    %145 = vmatprep.subr.bf16.mxu0 0
    %146 = vmatpush1.bf16.msra.mxu0 0
    %147 = vmatprep.subr.bf16.mxu0 0
    %148 = vmatpush1.bf16.msra.mxu0 %v128
    %149 = vmatprep.subr.bf16.mxu0 0
    %150 = vmatpush1.bf16.msra.mxu0 %v127
    %151 = vmatprep.subr.bf16.mxu0 0
    %152 = vmatpush2.bf16.msra.mxu0 0
    %153 = vmatprep.subr.bf16.mxu0 0
    %154 = vmatpush2.bf16.msra.mxu0 0
    %155 = vmatprep.subr.bf16.mxu0 0
    %156 = vmatpush2.bf16.msra.mxu0 0
    %157 = vmatprep.subr.bf16.mxu0 0
    %158 = vmatpush2.bf16.msra.mxu0 0
    %159 = vmatprep.subr.bf16.mxu0 0
    %160 = vmatpush2.bf16.msra.mxu0 0
    %161 = vmatprep.subr.bf16.mxu0 0
    %162 = vmatpush2.bf16.msra.mxu0 0
    %163 = vmatprep.subr.bf16.mxu0 0
    %164 = vmatpush2.bf16.msra.mxu0 0
    %165 = vmatprep.subr.bf16.mxu0 0
    %166 = vmatpush2.bf16.msra.mxu0 0
    %167 = vmatprep.mubr.bf16.mxu0 0
    %168 = vmatmul.mubr.bf16.gmra.mxu0 %v133
    %v169 = vpop.f32.mrf.mxu0
    %v170 = vadd.f32 %v117, %v169
    %v171 = vpop.f32.mrf.mxu0
    %v172 = vpop.f32.mrf.mxu0
    %v173 = vpop.f32.mrf.mxu0
    %174 = vdwg.mxu0
    %v175 = vmax.f32 %v170, 0.0
    %176 = vadd.xlane.f32.xlu0 %v175
    %v177 = vpop.xlane.xlu0 %176
    %v178 = vrcp.pop 128.0
    %v179 = vmul.f32 %v177, %v178
    %v180 = vmul.f32 %v175, %v175
    %181 = vadd.xlane.f32.xlu0 %v180
    %v182 = vpop.xlane.xlu0 %181
    %v183 = vmul.f32 %v182, %v178
    %v184 = vmul.f32 %v179, %v179
    %v185 = vsub.f32 %v183, %v184
    %v186 = vmax.f32 %v185, 0.0
    %v187 = vsub.f32 %v175, %v179
    %v188 = vadd.f32 %v186, 1e-05
    %v189 = vrsqrt.pop %v188
    %v190 = vmul.f32 %v187, %v189
    %v191 = vld [vmem:[%s3] sm:$0x1]
    %v193 = vlaneseq
    %v194 = vshrl.u32 %v193, 7
    %v195 = vsub.s32 0, %v194
    %v196 = vrot.slane %v191, %v195
    %v198 = vmul.f32 %v190, %v196
    %v199 = vld [vmem:[%s4] sm:$0x1]
    %v201 = vlaneseq
    %v202 = vshrl.u32 %v201, 7
    %v203 = vsub.s32 0, %v202
    %v204 = vrot.slane %v199, %v203
    %v206 = vadd.f32 %v198, %v204
    %v207 = vpack.c.bf16 %v206, %v206
    %v208 = vld [vmem:[#allocation7] sm:$0xf]
    %v209 = vld [vmem:[#allocation7 + $0x4] sm:$0xf]
    %v210 = vld [vmem:[#allocation7 + $0x8] sm:$0xf]
    %v211 = vld [vmem:[#allocation7 + $0xc] sm:$0xf]
    %v212 = vld [vmem:[#allocation7 + $0x10] sm:$0xf]
    %v213 = vld [vmem:[#allocation7 + $0x14] sm:$0xf]
    %v214 = vld [vmem:[#allocation7 + $0x18] sm:$0xf]
    %v215 = vld [vmem:[#allocation7 + $0x1c] sm:$0xf]
    %v216 = vld [vmem:[#allocation7 + $0x20] sm:$0xf]
    %v217 = vld [vmem:[#allocation7 + $0x24] sm:$0xf]
    %v218 = vld [vmem:[#allocation7 + $0x28] sm:$0xf]
    %v219 = vld [vmem:[#allocation7 + $0x2c] sm:$0xf]
    %v220 = vld [vmem:[#allocation7 + $0x30] sm:$0xf]
    %v221 = vld [vmem:[#allocation7 + $0x34] sm:$0xf]
    %v222 = vld [vmem:[#allocation7 + $0x38] sm:$0xf]
    %v223 = vld [vmem:[#allocation7 + $0x3c] sm:$0xf]
    %v224 = vld [vmem:[%s6] sm:$0x1]
    %v226 = vlaneseq
    %v227 = vshrl.u32 %v226, 7
    %v228 = vsub.s32 0, %v227
    %v229 = vrot.slane %v224, %v228
    %v247 = vunpack.c.l.b16 %v208
    %v248 = vunpack.c.l.b16 %v209
    %v249 = vunpack.c.l.b16 %v210
    %v250 = vunpack.c.l.b16 %v211
    %v251 = vunpack.c.l.b16 %v212
    %v252 = vunpack.c.l.b16 %v213
    %v253 = vunpack.c.l.b16 %v214
    %v254 = vunpack.c.l.b16 %v215
    %v255 = vunpack.c.l.b16 %v216
    %v256 = vunpack.c.l.b16 %v217
    %v257 = vunpack.c.l.b16 %v218
    %v258 = vunpack.c.l.b16 %v219
    %v259 = vunpack.c.l.b16 %v220
    %v260 = vunpack.c.l.b16 %v221
    %v261 = vunpack.c.l.b16 %v222
    %v262 = vunpack.c.l.b16 %v223
    %v263 = vpack.c.b16 %v248, %v247
    %v264 = vpack.c.b16 %v250, %v249
    %v265 = vpack.c.b16 %v252, %v251
    %v266 = vpack.c.b16 %v254, %v253
    %v267 = vpack.c.b16 %v256, %v255
    %v268 = vpack.c.b16 %v258, %v257
    %v269 = vpack.c.b16 %v260, %v259
    %v270 = vpack.c.b16 %v262, %v261
    %279 = vmatprep.subr.bf16.mxu0 0
    %280 = vmatpush1.bf16.msra.mxu0 %v270
    %281 = vmatprep.subr.bf16.mxu0 0
    %282 = vmatpush1.bf16.msra.mxu0 %v269
    %283 = vmatprep.subr.bf16.mxu0 0
    %284 = vmatpush1.bf16.msra.mxu0 %v268
    %285 = vmatprep.subr.bf16.mxu0 0
    %286 = vmatpush1.bf16.msra.mxu0 %v267
    %287 = vmatprep.subr.bf16.mxu0 0
    %288 = vmatpush1.bf16.msra.mxu0 %v266
    %289 = vmatprep.subr.bf16.mxu0 0
    %290 = vmatpush1.bf16.msra.mxu0 %v265
    %291 = vmatprep.subr.bf16.mxu0 0
    %292 = vmatpush1.bf16.msra.mxu0 %v264
    %293 = vmatprep.subr.bf16.mxu0 0
    %294 = vmatpush1.bf16.msra.mxu0 %v263
    %295 = vmatprep.subr.bf16.mxu0 0
    %296 = vmatpush2.bf16.msra.mxu0 0
    %297 = vmatprep.subr.bf16.mxu0 0
    %298 = vmatpush2.bf16.msra.mxu0 0
    %299 = vmatprep.subr.bf16.mxu0 0
    %300 = vmatpush2.bf16.msra.mxu0 0
    %301 = vmatprep.subr.bf16.mxu0 0
    %302 = vmatpush2.bf16.msra.mxu0 0
    %303 = vmatprep.subr.bf16.mxu0 0
    %304 = vmatpush2.bf16.msra.mxu0 0
    %305 = vmatprep.subr.bf16.mxu0 0
    %306 = vmatpush2.bf16.msra.mxu0 0
    %307 = vmatprep.subr.bf16.mxu0 0
    %308 = vmatpush2.bf16.msra.mxu0 0
    %309 = vmatprep.subr.bf16.mxu0 0
    %310 = vmatpush2.bf16.msra.mxu0 0
    %311 = vmatprep.mubr.bf16.mxu0 0
    %312 = vmatmul.mubr.bf16.gmra.mxu0 %v207
    %v313 = vpop.f32.mrf.mxu0
    %v314 = vadd.f32 %v229, %v313
    %v315 = vpop.f32.mrf.mxu0
    %v316 = vpop.f32.mrf.mxu0
    %v317 = vpop.f32.mrf.mxu0
    %318 = vdwg.mxu0
    %v319 = vmax.f32 %v314, 0.0
    %320 = vadd.xlane.f32.xlu0 %v319
    %v321 = vpop.xlane.xlu0 %320
    %v322 = vmul.f32 %v321, %v178
    %v323 = vmul.f32 %v319, %v319
    %324 = vadd.xlane.f32.xlu0 %v323
    %v325 = vpop.xlane.xlu0 %324
    %v326 = vmul.f32 %v325, %v178
    %v327 = vmul.f32 %v322, %v322
    %v328 = vsub.f32 %v326, %v327
    %v329 = vmax.f32 %v328, 0.0
    %v330 = vsub.f32 %v319, %v322
    %v331 = vadd.f32 %v329, 1e-05
    %v332 = vrsqrt.pop %v331
    %v333 = vmul.f32 %v330, %v332
    %v334 = vld [vmem:[%s7] sm:$0x1]
    %v336 = vlaneseq
    %v337 = vshrl.u32 %v336, 7
    %v338 = vsub.s32 0, %v337
    %v339 = vrot.slane %v334, %v338
    %v341 = vmul.f32 %v333, %v339
    %v342 = vld [vmem:[%s8] sm:$0x1]
    %v344 = vlaneseq
    %v345 = vshrl.u32 %v344, 7
    %v346 = vsub.s32 0, %v345
    %v347 = vrot.slane %v342, %v346
    %v349 = vadd.f32 %v341, %v347
    %v350 = vpack.c.bf16 %v349, %v349
    %v351 = vld [vmem:[#allocation8] sm:$0xf]
    %v352 = vld [vmem:[#allocation8 + $0x4] sm:$0xf]
    %v353 = vld [vmem:[#allocation8 + $0x8] sm:$0xf]
    %v354 = vld [vmem:[#allocation8 + $0xc] sm:$0xf]
    %v355 = vld [vmem:[#allocation8 + $0x10] sm:$0xf]
    %v356 = vld [vmem:[#allocation8 + $0x14] sm:$0xf]
    %v357 = vld [vmem:[#allocation8 + $0x18] sm:$0xf]
    %v358 = vld [vmem:[#allocation8 + $0x1c] sm:$0xf]
    %v359 = vld [vmem:[#allocation8 + $0x20] sm:$0xf]
    %v360 = vld [vmem:[#allocation8 + $0x24] sm:$0xf]
    %v361 = vld [vmem:[#allocation8 + $0x28] sm:$0xf]
    %v362 = vld [vmem:[#allocation8 + $0x2c] sm:$0xf]
    %v363 = vld [vmem:[#allocation8 + $0x30] sm:$0xf]
    %v364 = vld [vmem:[#allocation8 + $0x34] sm:$0xf]
    %v365 = vld [vmem:[#allocation8 + $0x38] sm:$0xf]
    %v366 = vld [vmem:[#allocation8 + $0x3c] sm:$0xf]
    %v367 = vld [vmem:[%s10] sm:$0x1]
    %v369 = vlaneseq
    %v370 = vshrl.u32 %v369, 7
    %v371 = vsub.s32 0, %v370
    %v372 = vrot.slane %v367, %v371
    %v390 = vunpack.c.l.b16 %v351
    %v391 = vunpack.c.l.b16 %v352
    %v392 = vunpack.c.l.b16 %v353
    %v393 = vunpack.c.l.b16 %v354
    %v394 = vunpack.c.l.b16 %v355
    %v395 = vunpack.c.l.b16 %v356
    %v396 = vunpack.c.l.b16 %v357
    %v397 = vunpack.c.l.b16 %v358
    %v398 = vunpack.c.l.b16 %v359
    %v399 = vunpack.c.l.b16 %v360
    %v400 = vunpack.c.l.b16 %v361
    %v401 = vunpack.c.l.b16 %v362
    %v402 = vunpack.c.l.b16 %v363
    %v403 = vunpack.c.l.b16 %v364
    %v404 = vunpack.c.l.b16 %v365
    %v405 = vunpack.c.l.b16 %v366
    %v406 = vpack.c.b16 %v391, %v390
    %v407 = vpack.c.b16 %v393, %v392
    %v408 = vpack.c.b16 %v395, %v394
    %v409 = vpack.c.b16 %v397, %v396
    %v410 = vpack.c.b16 %v399, %v398
    %v411 = vpack.c.b16 %v401, %v400
    %v412 = vpack.c.b16 %v403, %v402
    %v413 = vpack.c.b16 %v405, %v404
    %422 = vmatprep.subr.bf16.mxu0 0
    %423 = vmatpush1.bf16.msra.mxu0 %v413
    %424 = vmatprep.subr.bf16.mxu0 0
    %425 = vmatpush1.bf16.msra.mxu0 %v412
    %426 = vmatprep.subr.bf16.mxu0 0
    %427 = vmatpush1.bf16.msra.mxu0 %v411
    %428 = vmatprep.subr.bf16.mxu0 0
    %429 = vmatpush1.bf16.msra.mxu0 %v410
    %430 = vmatprep.subr.bf16.mxu0 0
    %431 = vmatpush1.bf16.msra.mxu0 %v409
    %432 = vmatprep.subr.bf16.mxu0 0
    %433 = vmatpush1.bf16.msra.mxu0 %v408
    %434 = vmatprep.subr.bf16.mxu0 0
    %435 = vmatpush1.bf16.msra.mxu0 %v407
    %436 = vmatprep.subr.bf16.mxu0 0
    %437 = vmatpush1.bf16.msra.mxu0 %v406
    %438 = vmatprep.subr.bf16.mxu0 0
    %439 = vmatpush2.bf16.msra.mxu0 0
    %440 = vmatprep.subr.bf16.mxu0 0
    %441 = vmatpush2.bf16.msra.mxu0 0
    %442 = vmatprep.subr.bf16.mxu0 0
    %443 = vmatpush2.bf16.msra.mxu0 0
    %444 = vmatprep.subr.bf16.mxu0 0
    %445 = vmatpush2.bf16.msra.mxu0 0
    %446 = vmatprep.subr.bf16.mxu0 0
    %447 = vmatpush2.bf16.msra.mxu0 0
    %448 = vmatprep.subr.bf16.mxu0 0
    %449 = vmatpush2.bf16.msra.mxu0 0
    %450 = vmatprep.subr.bf16.mxu0 0
    %451 = vmatpush2.bf16.msra.mxu0 0
    %452 = vmatprep.subr.bf16.mxu0 0
    %453 = vmatpush2.bf16.msra.mxu0 0
    %454 = vmatprep.mubr.bf16.mxu0 0
    %455 = vmatmul.mubr.bf16.gmra.mxu0 %v350
    %v456 = vpop.f32.mrf.mxu0
    %v457 = vadd.f32 %v372, %v456
    %v458 = vpop.f32.mrf.mxu0
    %v459 = vpop.f32.mrf.mxu0
    %v460 = vpop.f32.mrf.mxu0
    %461 = vdwg.mxu0
    %v462 = vmax.f32 %v457, 0.0
    %463 = vadd.xlane.f32.xlu0 %v462
    %v464 = vpop.xlane.xlu0 %463
    %v465 = vmul.f32 %v464, %v178
    %v466 = vmul.f32 %v462, %v462
    %467 = vadd.xlane.f32.xlu0 %v466
    %v468 = vpop.xlane.xlu0 %467
    %v469 = vmul.f32 %v468, %v178
    %v470 = vmul.f32 %v465, %v465
    %v471 = vsub.f32 %v469, %v470
    %v472 = vmax.f32 %v471, 0.0
    %v473 = vsub.f32 %v462, %v465
    %v474 = vadd.f32 %v472, 1e-05
    %v475 = vrsqrt.pop %v474
    %v476 = vmul.f32 %v473, %v475
    %v477 = vld [vmem:[%s11] sm:$0x1]
    %v479 = vlaneseq
    %v480 = vshrl.u32 %v479, 7
    %v481 = vsub.s32 0, %v480
    %v482 = vrot.slane %v477, %v481
    %v484 = vmul.f32 %v476, %v482
    %v485 = vld [vmem:[%s12] sm:$0x1]
    %v487 = vlaneseq
    %v488 = vshrl.u32 %v487, 7
    %v489 = vsub.s32 0, %v488
    %v490 = vrot.slane %v485, %v489
    %v492 = vadd.f32 %v484, %v490
    %v493 = vld [vmem:[%s13] sm:$0x1]
    %v495 = vlaneseq
    %v496 = vshrl.u32 %v495, 7
    %v497 = vsub.s32 0, %v496
    %v498 = vrot.slane %v493, %v497
    %v500 = vmul.f32 %v492, %v498
    %501 = vadd.xlane.f32.xlu0 %v500
    %v502 = vpop.xlane.xlu0 %501
    %v503 = vld [vmem:[#allocation2] sm:$0x1]
    %v505 = vlaneseq
    %v506 = vshrl.u32 %v505, 7
    %v507 = vsub.s32 0, %v506
    %v508 = vrot.slane %v503, %v507
    %v510 = vadd.f32 %v502, %v508
    %vm511 = vcmask 7168
    %512 = vst.msk [vmem:[%s15] sm:$0xff] %vm511, %v510
    // Predicated region
    $region78: #{tpu_custom_call.1} parent=1 // pred_check
      _
    $region79: #{tpu_custom_call.1} parent=1 // pred_check_branch
      %514 = sbr.rel (0) target = $region81
    $region80: #{tpu_custom_call.1} parent=1 // pred_region
      _
    $region81: #{tpu_custom_call.1} parent=1 // pred_fallthru
      _
    // Predicated region
    $region82: #{tpu_custom_call.1} parent=1 // pred_check
      _
    $region83: #{tpu_custom_call.1} parent=1 // pred_check_branch
      %516 = sbr.rel (0) target = $region85
    $region84: #{tpu_custom_call.1} parent=1 // pred_region
      _
    $region85: #{tpu_custom_call.1} parent=1 // pred_fallthru
      _
    %517 = vsyncpa [#allocation4], 1
    %518 = vsyncpa [#allocation6], 1
    %519 = vsyncpa [#allocation9], 1

</llo_original>
